<compile_context>
chip_gen: v7x
topology: tpu7x:2x2x1
jax: 0.10.0
libtpu: 0.0.40
codegen_flags: <defaults>
</compile_context>

<pallas_src>
import functools

import jax
import jax.numpy as jnp
import numpy as np
from jax import lax
from jax.experimental import pallas as pl
from jax.experimental.pallas import tpu as pltpu

_LANE = 128
_SUBLANE = 8
_ELTWISE_TARGET_BYTES = 4 << 20       # elementwise input block target
_CHANNEL_TARGET_BYTES = 2 << 20       # channel softmax/argmax (f32/int32 temps)
_FLAT_ARGMAX_TARGET_BYTES = 4 << 20
_VMEM_LIMIT = 32 * 1024 * 1024        # safe on v5e/v6e (128 MiB) and v7x (64 MiB)
_INT32_MAX = int(np.iinfo(np.int32).max)


def _compiler_params(semantics):
    return pltpu.CompilerParams(
        dimension_semantics=semantics,
        vmem_limit_bytes=_VMEM_LIMIT,
    )


def _pick_row_tile(rows, row_bytes, target):
    """Largest row tile (multiple of 8, or == rows) targeting `target` bytes."""
    if rows <= _SUBLANE:
        return rows
    t = target // max(1, row_bytes)
    t = max(_SUBLANE, min(t, rows))
    if t >= rows:
        return rows
    return max(_SUBLANE, (t // _SUBLANE) * _SUBLANE)


def _channel_tiles(pre, c, post, bpe, target):
    """(tile_pre, tile_post) for (pre, C, post) blocks reducing over axis=1."""
    per_col = max(1, c * bpe)
    tp_budget = target // per_col
    if post <= _LANE or tp_budget >= post:
        tp = post
    else:
        tp = max(_LANE, (min(tp_budget, post) // _LANE) * _LANE)
    blk = max(1, c * tp * bpe)
    tile_pre = int(max(1, min(pre, target // blk)))
    return tile_pre, tp


# ----------------------------- elementwise --------------------------------- #

def _eltwise_kernel(x_ref, o_ref, *, op, cmin, cmax):
    x = x_ref[...]
    if op == "sigmoid":
        # TODO(synk): bf16-native path on v6e/v7x would halve vreg footprint;
        # kernels are HBM-bound so the f32 upcast is kept for uniformity.
        y = jax.nn.sigmoid(x.astype(jnp.float32))
    elif op == "tanh":
        y = jnp.tanh(x.astype(jnp.float32))
    elif op == "relu":
        y = jnp.maximum(x, jnp.zeros_like(x))
    elif op == "clamp":
        y = jnp.clip(x, cmin, cmax)          # stays in the input dtype domain
    else:
        raise ValueError(op)
    o_ref[...] = y.astype(o_ref.dtype)


def _eltwise_jnp(x, op, cmin=None, cmax=None):
    if op == "sigmoid":
        return jax.nn.sigmoid(x.astype(jnp.float32)).astype(x.dtype)
    if op == "tanh":
        return jnp.tanh(x.astype(jnp.float32)).astype(x.dtype)
    if op == "relu":
        return jnp.maximum(x, jnp.zeros_like(x))
    if op == "clamp":
        return jnp.clip(x, cmin, cmax)
    raise ValueError(op)


def _eltwise(x, op, cmin=None, cmax=None):
    orig_shape = x.shape
    n = int(x.size)
    if n == 0:
        return x
    n_main = (n // _LANE) * _LANE
    if n_main == 0:
        # Tiny tensor (<128 elems): kernel launch overhead isn't worth it.
        return _eltwise_jnp(x, op, cmin, cmax)
    flat = x.reshape(-1)
    main = flat if n_main == n else flat[:n_main]
    # lane-dense 2-D view; prefer >=8 rows so full vregs are used.
    cols = _LANE
    for cc in (8192, 4096, 2048, 1024, 512, 256):
        if n_main % cc == 0 and n_main // cc >= _SUBLANE:
            cols = cc
            break
    rows = n_main // cols
    x2 = main.reshape(rows, cols)
    tile_r = _pick_row_tile(rows, cols * max(4, x2.dtype.itemsize),
                            _ELTWISE_TARGET_BYTES)
    kern = functools.partial(_eltwise_kernel, op=op, cmin=cmin, cmax=cmax)
    y2 = pl.pallas_call(
        kern,
        out_shape=jax.ShapeDtypeStruct((rows, cols), x.dtype),
        grid=(pl.cdiv(rows, tile_r),),
        in_specs=[pl.BlockSpec((tile_r, cols), lambda i: (i, 0))],
        out_specs=pl.BlockSpec((tile_r, cols), lambda i: (i, 0)),
        compiler_params=_compiler_params(("parallel",)),
    )(x2)
    out = y2.reshape(-1)
    if n_main != n:
        # TODO(synk): rare misaligned path still pays one concat copy of the
        # main part; the <128-element tail itself runs in plain jnp.
        tail = _eltwise_jnp(flat[n_main:], op, cmin, cmax)
        out = jnp.concatenate([out, tail])
    return out.reshape(orig_shape)


# ------------------------- softmax / logsoftmax ----------------------------- #

def _softmax_channel_kernel(x_ref, o_ref, *, log):
    # block (TILE_PRE, C, tp): reduce over channel (sublane) axis, lanes dense.
    x = x_ref[...].astype(jnp.float32)
    m = jnp.max(x, axis=1, keepdims=True)
    e = jnp.exp(x - m)
    s = jnp.sum(e, axis=1, keepdims=True)
    y = (x - m) - jnp.log(s) if log else e / s
    o_ref[...] = y.astype(o_ref.dtype)


def _softmax_lane_kernel(x_ref, o_ref, *, log):
    # block (R, C): reduce over the last (lane) axis; used when dim=1 is last.
    x = x_ref[...].astype(jnp.float32)
    m = jnp.max(x, axis=-1, keepdims=True)
    e = jnp.exp(x - m)
    s = jnp.sum(e, axis=-1, keepdims=True)
    y = (x - m) - jnp.log(s) if log else e / s
    o_ref[...] = y.astype(o_ref.dtype)


def _softmax_dim1(x, log):
    if x.ndim < 2:
        raise ValueError("softmax(dim=1) requires ndim >= 2")
    pre, c = x.shape[0], x.shape[1]
    post = int(np.prod(x.shape[2:])) if x.ndim > 2 else 1
    bpe = max(4, x.dtype.itemsize)            # f32 intermediates
    if post > 1:
        if c * min(post, _LANE) * bpe * 8 > _VMEM_LIMIT:
            # TODO(synk): streaming (two-pass) channel softmax for very large C.
            return jax.nn.log_softmax(x, axis=1) if log else jax.nn.softmax(x, axis=1)
        x3 = x.reshape(pre, c, post)          # pure reshape, no HBM transpose
        tile_pre, tp = _channel_tiles(pre, c, post, bpe, _CHANNEL_TARGET_BYTES)
        y3 = pl.pallas_call(
            functools.partial(_softmax_channel_kernel, log=log),
            out_shape=jax.ShapeDtypeStruct((pre, c, post), x.dtype),
            grid=(pl.cdiv(pre, tile_pre), pl.cdiv(post, tp)),
            in_specs=[pl.BlockSpec((tile_pre, c, tp), lambda i, j: (i, 0, j))],
            out_specs=pl.BlockSpec((tile_pre, c, tp), lambda i, j: (i, 0, j)),
            compiler_params=_compiler_params(("parallel", "parallel")),
        )(x3)
        return y3.reshape(x.shape)
    # 2-D input: channel axis is already last -> lane-axis reduce, tile rows.
    if c * _SUBLANE * bpe * 8 > _VMEM_LIMIT:
        # TODO(synk): streaming lane softmax for a very large last dim.
        return jax.nn.log_softmax(x, axis=1) if log else jax.nn.softmax(x, axis=1)
    x2 = x.reshape(pre, c)
    tile_r = _pick_row_tile(pre, c * bpe, _CHANNEL_TARGET_BYTES)
    y2 = pl.pallas_call(
        functools.partial(_softmax_lane_kernel, log=log),
        out_shape=jax.ShapeDtypeStruct((pre, c), x.dtype),
        grid=(pl.cdiv(pre, tile_r),),
        in_specs=[pl.BlockSpec((tile_r, c), lambda i: (i, 0))],
        out_specs=pl.BlockSpec((tile_r, c), lambda i: (i, 0)),
        compiler_params=_compiler_params(("parallel",)),
    )(x2)
    return y2.reshape(x.shape)


# --------------------------------- argmax ----------------------------------- #

def _argmax_channel_kernel(x_ref, o_ref):
    # block (TILE_PRE, C, tp): first-occurrence argmax over the channel axis.
    x = x_ref[...]
    m = jnp.max(x, axis=1, keepdims=True)
    c = x.shape[1]
    ci = lax.broadcasted_iota(jnp.int32, x.shape, 1)
    idx = jnp.min(jnp.where(x == m, ci, c), axis=1, keepdims=True)
    o_ref[...] = idx.astype(jnp.int32)


def _argmax_lane_kernel(x_ref, o_ref):
    # block (R, C): first-occurrence argmax over the last (lane) axis.
    x = x_ref[...]
    m = jnp.max(x, axis=-1, keepdims=True)
    c = x.shape[-1]
    ci = lax.broadcasted_iota(jnp.int32, x.shape, x.ndim - 1)
    idx = jnp.min(jnp.where(x == m, ci, c), axis=-1, keepdims=True)
    o_ref[...] = idx.astype(jnp.int32)


def _argmax_dim(x, dim):
    nd = x.ndim
    dim = dim % nd
    pre = int(np.prod(x.shape[:dim])) if dim > 0 else 1
    c = x.shape[dim]
    post = int(np.prod(x.shape[dim + 1:])) if dim + 1 < nd else 1
    out_shape = x.shape[:dim] + x.shape[dim + 1:]
    if post == 1 and pre == 1:
        return _argmax_flat(x).reshape(out_shape)
    bpe = x.dtype.itemsize + 8        # input value + int32 iota/compare temps
    if post > 1:
        if c * min(post, _LANE) * bpe * 8 > _VMEM_LIMIT:
            # TODO(synk): streaming channel-axis argmax for very large C.
            return jnp.argmax(x, axis=dim).astype(jnp.int32)
        x3 = x.reshape(pre, c, post)          # pure reshape, no HBM transpose
        tile_pre, tp = _channel_tiles(pre, c, post, bpe, _CHANNEL_TARGET_BYTES)
        y3 = pl.pallas_call(
            _argmax_channel_kernel,
            out_shape=jax.ShapeDtypeStruct((pre, 1, post), jnp.int32),
            grid=(pl.cdiv(pre, tile_pre), pl.cdiv(post, tp)),
            in_specs=[pl.BlockSpec((tile_pre, c, tp), lambda i, j: (i, 0, j))],
            out_specs=pl.BlockSpec((tile_pre, 1, tp), lambda i, j: (i, 0, j)),
            compiler_params=_compiler_params(("parallel", "parallel")),
        )(x3)
        return y3.reshape(out_shape)
    # reduction over the last axis: lane-axis argmax, tiled over rows.
    x2 = x.reshape(pre, c)
    tile_r = _pick_row_tile(pre, c * bpe, _CHANNEL_TARGET_BYTES)
    y2 = pl.pallas_call(
        _argmax_lane_kernel,
        out_shape=jax.ShapeDtypeStruct((pre, 1), jnp.int32),
        grid=(pl.cdiv(pre, tile_r),),
        in_specs=[pl.BlockSpec((tile_r, c), lambda i: (i, 0))],
        out_specs=pl.BlockSpec((tile_r, 1), lambda i: (i, 0)),
        compiler_params=_compiler_params(("parallel",)),
    )(x2)
    return y2.reshape(out_shape)


def _argmax_flat_stage1_kernel(x_ref, maxo_ref, idxo_ref, *,
                               tile_r, nb_half, rows_valid, need_mask, fill):
    # block (tile_r, 128): per-lane running (max, flat index) accumulated in
    # the resident (1, 8, 128) output blocks of half `h` across the inner axis.
    h = pl.program_id(0)
    i = pl.program_id(1)
    block_row0 = (h * nb_half + i) * tile_r            # global first row
    x = x_ref[...]
    if need_mask:  # static: only emitted on the ragged/clamped path
        row = lax.broadcasted_iota(jnp.int32, (x.shape[0], 1), 0)
        x = jnp.where(block_row0 + row < rows_valid, x, fill)
    colmax = jnp.max(x, axis=0, keepdims=True)                           # (1,128)
    rowi = lax.broadcasted_iota(jnp.int32, x.shape, 0)
    first_row = jnp.min(jnp.where(x == colmax, rowi, x.shape[0]),
                        axis=0, keepdims=True)                           # (1,128)
    lane = lax.broadcasted_iota(jnp.int32, (1, _LANE), 1)
    colidx = (block_row0 + first_row) * _LANE + lane                     # (1,128)
    colmax3 = jnp.broadcast_to(colmax.reshape(1, 1, _LANE), (1, _SUBLANE, _LANE))
    colidx3 = jnp.broadcast_to(colidx.reshape(1, 1, _LANE), (1, _SUBLANE, _LANE))

    @pl.when(i == 0)
    def _():
        maxo_ref[...] = colmax3
        idxo_ref[...] = colidx3

    @pl.when(i > 0)
    def _():
        prev_max = maxo_ref[...]
        prev_idx = idxo_ref[...]
        better = colmax3 > prev_max                  # strict > keeps first hit
        maxo_ref[...] = jnp.where(better, colmax3, prev_max)
        idxo_ref[...] = jnp.where(better, colidx3, prev_idx)


def _argmax_flat_stage2_kernel(max_ref, idx_ref, o_ref):
    # sublanes hold identical copies -> reducing over axis=1 just collapses them.
    m = jnp.max(max_ref[...], axis=1)                  # (split, 128)
    idx = jnp.min(idx_ref[...], axis=1)                # (split, 128)
    gmax = jnp.max(jnp.max(m, axis=0, keepdims=True), axis=1, keepdims=True)
    cand = jnp.where(m == gmax, idx, _INT32_MAX)
    o_ref[...] = jnp.min(jnp.min(cand, axis=0, keepdims=True),
                         axis=1, keepdims=True).astype(jnp.int32)


def _argmax_flat(x):
    n = int(x.size)
    if jnp.issubdtype(x.dtype, jnp.floating):
        fill = float("-inf")
    else:
        fill = int(jnp.iinfo(x.dtype).min)
    flat = x.reshape(-1)
    pad = (-n) % _LANE
    if pad:
        # fill-padding (static, rare) removes per-element masking in-kernel.
        flat = jnp.pad(flat, (0, pad), constant_values=fill)
    rows = (n + pad) // _LANE
    x2 = flat.reshape(rows, _LANE)
    tile_r = _pick_row_tile(rows, _LANE * (x.dtype.itemsize + 4),
                            _FLAT_ARGMAX_TARGET_BYTES)
    nb = pl.cdiv(rows, tile_r)
    split = 2 if nb >= 2 else 1      # 2 "parallel" halves -> both v7x TCs stream
    nb_half = pl.cdiv(nb, split)
    need_mask = (rows % tile_r != 0) or (split * nb_half != nb)
    if split * nb_half == nb:
        in_map = lambda h, i: (h * nb_half + i, 0)
    else:
        # clamp the (rare) overshooting block of half 1; its rows are masked.
        in_map = lambda h, i: (jnp.minimum(h * nb_half + i, nb - 1), 0)
    kern = functools.partial(
        _argmax_flat_stage1_kernel, tile_r=tile_r, nb_half=nb_half,
        rows_valid=rows, need_mask=need_mask, fill=fill)
    bmax, bidx = pl.pallas_call(
        kern,
        out_shape=(jax.ShapeDtypeStruct((split, _SUBLANE, _LANE), x.dtype),
                   jax.ShapeDtypeStruct((split, _SUBLANE, _LANE), jnp.int32)),
        grid=(split, nb_half),
        in_specs=[pl.BlockSpec((tile_r, _LANE), in_map)],
        out_specs=(pl.BlockSpec((1, _SUBLANE, _LANE), lambda h, i: (h, 0, 0)),
                   pl.BlockSpec((1, _SUBLANE, _LANE), lambda h, i: (h, 0, 0))),
        compiler_params=_compiler_params(("parallel", "arbitrary")),
    )(x2)
    out = pl.pallas_call(
        _argmax_flat_stage2_kernel,
        out_shape=jax.ShapeDtypeStruct((1, 1), jnp.int32),
    )(bmax, bidx)
    return out.reshape(())


# --------------------------------- module ----------------------------------- #

class Activation:
    """JAX/Pallas port of the PyTorch `Activation` dispatcher."""

    def __init__(self, name, **params):
        if name is None or name == "identity":
            self._fn = lambda x: x            # pass-through: no kernel needed
        elif name == "sigmoid":
            self._fn = lambda x: _eltwise(x, "sigmoid")
        elif name == "softmax":
            self._fn = lambda x: _softmax_dim1(x, log=False)
        elif name == "logsoftmax":
            self._fn = lambda x: _softmax_dim1(x, log=True)
        elif name == "tanh":
            self._fn = lambda x: _eltwise(x, "tanh")
        elif name == "argmax":
            dim = params.get("dim", None)
            if dim is None:
                self._fn = _argmax_flat
            else:
                self._fn = lambda x: _argmax_dim(x, dim)
        elif name == "clamp":
            cmin = params.get("min", 0)
            cmax = params.get("max", 1)
            self._fn = lambda x: _eltwise(x, "clamp", cmin=cmin, cmax=cmax)
        elif name == "relu":
            self._fn = lambda x: _eltwise(x, "relu")
        elif callable(name):
            # TODO(synk): user-supplied callables run as plain JAX (no Pallas lowering).
            self._fn = name(**params)
        else:
            raise ValueError(
                "Activation should be callable/sigmoid/softmax/logsoftmax/"
                f"tanh/argmax/clamp/relu/None; got {name}"
            )

    def __call__(self, x):
        return self._fn(x)


# --------------------------------- demo -------------------------------------- #

if __name__ == "__main__":
    key = jax.random.PRNGKey(0)
    x = jax.random.normal(key, (2, 4, 16, 16), dtype=jnp.float32)  # NCHW

    results = {
        "identity": Activation("identity")(x),
        "sigmoid": Activation("sigmoid")(x),
        "softmax": Activation("softmax")(x),
        "logsoftmax": Activation("logsoftmax")(x),
        "tanh": Activation("tanh")(x),
        "relu": Activation("relu")(x),
        "clamp": Activation("clamp", min=-0.5, max=0.5)(x),
        "argmax_dim1": Activation("argmax", dim=1)(x),
        "argmax_last": Activation("argmax", dim=-1)(x),
        "argmax_none": Activation("argmax")(x),
    }
    for v in results.values():
        jax.block_until_ready(v)

    # correctness vs. plain-JAX references
    np.testing.assert_allclose(results["identity"], x, atol=0)
    np.testing.assert_allclose(results["sigmoid"], jax.nn.sigmoid(x), atol=1e-6)
    np.testing.assert_allclose(results["softmax"], jax.nn.softmax(x, axis=1), atol=1e-6)
    np.testing.assert_allclose(results["logsoftmax"], jax.nn.log_softmax(x, axis=1), atol=1e-5)
    np.testing.assert_allclose(results["tanh"], jnp.tanh(x), atol=1e-6)
    np.testing.assert_allclose(results["relu"], jnp.maximum(x, 0), atol=0)
    np.testing.assert_allclose(results["clamp"], jnp.clip(x, -0.5, 0.5), atol=0)
    np.testing.assert_array_equal(results["argmax_dim1"], jnp.argmax(x, axis=1))
    np.testing.assert_array_equal(results["argmax_last"], jnp.argmax(x, axis=-1))
    np.testing.assert_array_equal(results["argmax_none"], jnp.argmax(x))

    print("KERNEL_OK")
</pallas_src>

<mosaic_0001>
module attributes {stable_mosaic.version = 11 : i64} {
  func.func @_eltwise_kernel(%arg0: i32, %arg1: memref<8x256xf32, #tpu.memory_space<vmem>>, %arg2: memref<8x256xf32, #tpu.memory_space<vmem>>) attributes {dimension_semantics = [#tpu.dimension_semantics<parallel>], iteration_bounds = array<i64: 1>, scalar_prefetch = 0 : i64, scratch_operands = 0 : i64, tpu.core_type = #tpu.core_type<tc>, window_params = [{transform_indices = @transform_0, window_bounds = array<i64: 8, 256>}, {transform_indices = @transform_1, window_bounds = array<i64: 8, 256>}]} {
    %c0 = arith.constant 0 : index
    %c0_0 = arith.constant 0 : index
    %0 = vector.load %arg1[%c0, %c0_0] : memref<8x256xf32, #tpu.memory_space<vmem>>, vector<8x256xf32>
    %1 = arith.negf %0 : vector<8x256xf32>
    %2 = math.exp %1 : vector<8x256xf32>
    %cst = arith.constant 1.000000e+00 : f32
    %3 = vector.broadcast %cst : f32 to vector<8x256xf32>
    %4 = arith.addf %3, %2 : vector<8x256xf32>
    %5 = arith.divf %3, %4 : vector<8x256xf32>
    %c0_1 = arith.constant 0 : index
    %c0_2 = arith.constant 0 : index
    %6 = vector.load %arg2[%c0_1, %c0_2] : memref<8x256xf32, #tpu.memory_space<vmem>>, vector<8x256xf32>
    tpu.vector_store %arg2[%c0_1, %c0_2], %5 {strides = array<i32>} : memref<8x256xf32, #tpu.memory_space<vmem>>, vector<8x256xf32>,
    return
  }
  func.func @transform_0(%arg0: i32) -> (i32, i32) {
    %c0_i32 = arith.constant 0 : i32
    %c0_i32_0 = arith.constant 0 : i32
    return %arg0, %c0_i32 : i32, i32
  }
  func.func @transform_1(%arg0: i32) -> (i32, i32) {
    %c0_i32 = arith.constant 0 : i32
    %c0_i32_0 = arith.constant 0 : i32
    return %arg0, %c0_i32 : i32, i32
  }
}

</mosaic_0001>

<llo_original>
// kernel: tpu_custom_call.1
$region0: #{tpu_custom_call.1}
  #allocation0 [shape = 'u32[]', space=smem, size = 0x4, offset = 0x4, fixed_abs, tag = 'smem constant byte address 0x4 - core index']
  #allocation1 [shape = 'u32[144,128]{1,0:T(1,128)}', space=vmem, size = 0x12000, scoped, tag = 'internal scratch']
  %s0 = inlined_call_operand.hbm [shape: f32[8,256], index: 0, kind: input, shape index: {}]
  %s1 = inlined_call_operand.hbm [shape: f32[8,256], index: 1, kind: output, shape index: {}]
  %s2 = sld [smem:[#allocation0]]
  $region18: #{tpu_custom_call.1} parent=0
    _
  %s4 = ssub.s32 1, %s2
  %s5 = scalar_select 0, %s4, %s2
  $region1: #{tpu_custom_call.1} parent=0
    #allocation2 [shape = 'u8[8192]{0}', space=vmem, size = 0x2000, scoped, tag = 'input window, operand 0, single buffered']
    #allocation3 [shape = 's32[1]{0}', space=sflag, size = 0x4, scoped, tag = 'scoped memory for tpu_custom_call.1']
    #allocation4 [shape = 's32[1]{0}', space=sflag, size = 0x4, scoped, tag = 'scoped memory for tpu_custom_call.1']
    #allocation5 [shape = 'u8[8192]{0}', space=vmem, size = 0x2000, scoped, tag = 'output window, operand 0, single buffered']
    %6 = vsyncpa [#allocation3], 0
    %7 = vsyncpa [#allocation4], 0
    // Predicated region
    $region2: #{tpu_custom_call.1} parent=1 // pred_check
      _
    $region3: #{tpu_custom_call.1} parent=1 // pred_check_branch
      %9 = sbr.rel (0) target = $region5
    $region4: #{tpu_custom_call.1} parent=1 // pred_region
      %s11 = ssub.s32 256, 256
      %12 = vsyncadd [#allocation3], %s11
      %s14 = sshll.u32 [#allocation2], 4
      %s15 = int_to_ptr.vmem [resolvable:$true] %s14
      %17 = dma.hbm_to_vmem [thread:$0]  %s0, 256, %s15, [#allocation3]
    $region5: #{tpu_custom_call.1} parent=1 // pred_fallthru
      _
    // Predicated region
    $region6: #{tpu_custom_call.1} parent=1 // pred_check
      _
    $region7: #{tpu_custom_call.1} parent=1 // pred_check_branch
      %19 = sbr.rel (0) target = $region9
    $region8: #{tpu_custom_call.1} parent=1 // pred_region
      %20 = dma.done [#allocation3], 256
    $region9: #{tpu_custom_call.1} parent=1 // pred_fallthru
      _
    %v21 = vld [vmem:[#allocation2] sm:$0xff]
    %v22 = vld [vmem:[#allocation2 + $0x8] sm:$0xff]
    %v23 = vxor.u32 %v21, 2147483648
    %v24 = vxor.u32 %v22, 2147483648
    %v25 = vmul.f32 %v23, 1.442695
    %v26 = vpow.pop %v25
    %v27 = vmul.f32 %v24, 1.442695
    %v28 = vpow.pop %v27
    %v29 = vadd.f32 %v26, 1.0
    %v30 = vadd.f32 %v28, 1.0
    %v31 = vrcp.pop %v29
    %v32 = vmul.f32 1.0, %v31
    %v33 = vrcp.pop %v30
    %v34 = vmul.f32 1.0, %v33
    %35 = vst [vmem:[#allocation5] sm:$0xff] %v32
    %36 = vst [vmem:[#allocation5 + $0x8] sm:$0xff] %v34
    // Predicated region
    $region10: #{tpu_custom_call.1} parent=1 // pred_check
      _
    $region11: #{tpu_custom_call.1} parent=1 // pred_check_branch
      %38 = sbr.rel (0) target = $region13
    $region12: #{tpu_custom_call.1} parent=1 // pred_region
      %s40 = ssub.s32 256, 256
      %41 = vsyncadd [#allocation4], %s40
      %s43 = sshll.u32 [#allocation5], 4
      %s44 = int_to_ptr.vmem [resolvable:$true] %s43
      %46 = dma.vmem_to_hbm [thread:$0]  %s44, 256, %s1, [#allocation4]
    $region13: #{tpu_custom_call.1} parent=1 // pred_fallthru
      _
    // Predicated region
    $region14: #{tpu_custom_call.1} parent=1 // pred_check
      _
    $region15: #{tpu_custom_call.1} parent=1 // pred_check_branch
      %48 = sbr.rel (0) target = $region17
    $region16: #{tpu_custom_call.1} parent=1 // pred_region
      %49 = dma.done [#allocation4], 256
    $region17: #{tpu_custom_call.1} parent=1 // pred_fallthru
      _
    %50 = vsyncpa [#allocation3], 1
    %51 = vsyncpa [#allocation4], 1

</llo_original>
